<compile_context>
chip_gen: v6e
topology: v6e:2x2x1
jax: 0.10.0
libtpu: 0.0.40
codegen_flags: <defaults>
</compile_context>

<pallas_src>
import numpy as np

import jax
import jax.numpy as jnp
from jax.experimental import pallas as pl
from jax.experimental.pallas import tpu as pltpu


def _round_up(x, m):
    return ((x + m - 1) // m) * m


def _make_mlp_kernel(m_embed, m_hidden, m_readout, inv_gamma):
    """Builds the kernel body with static (per-role) multipliers and 1/gamma."""
    m_embed = float(m_embed)
    m_hidden = float(m_hidden)
    out_scale = float(m_readout) * float(inv_gamma)

    def kernel(x_ref, w0_ref, wh_ref, wf_ref, o_ref, h_ref):
        k = pl.program_id(1)
        n_hidden = pl.num_programs(1)

        # Embedding layer (runs once per batch tile): h = relu(m0 * x @ W0^T).
        @pl.when(k == 0)
        def _embed():
            h0 = jnp.dot(
                x_ref[...].astype(jnp.bfloat16),
                w0_ref[...],
                preferred_element_type=jnp.float32,
            )
            h_ref[...] = jnp.maximum(h0 * m_embed, 0.0)

        # Hidden layer k (weights streamed one layer per grid step):
        #   h = relu(m_h * h @ Wk^T)
        h = jnp.dot(
            h_ref[...].astype(jnp.bfloat16),
            wh_ref[0],
            preferred_element_type=jnp.float32,
        )
        h_ref[...] = jnp.maximum(h * m_hidden, 0.0)

        # Readout after the last hidden layer: out = m_r * (h @ Wf^T) / gamma.
        # Done as a VPU multiply + lane reduction (avoids a 1-column MXU tile).
        @pl.when(k == n_hidden - 1)
        def _readout():
            out = jnp.sum(h_ref[...] * wf_ref[...], axis=-1, keepdims=True)
            o_ref[...] = (out * out_scale).astype(o_ref.dtype)

    return kernel


def deepnn_forward(x, w0_t, wh_t, wf, param_multipliers, gamma, *, tile_b=128):
    """Full DeepNN forward in a single Pallas call.

    x:    [B, d]          float32
    w0_t: [d, H]          (first Linear weight, transposed)
    wh_t: [depth-1, H, H] (hidden Linear weights, each transposed, stacked)
    wf:   [1, H]          (readout weight, torch layout)
    returns [B] float32
    """
    B, d = x.shape
    depth = wh_t.shape[0] + 1
    H = w0_t.shape[1]
    # TODO(synk): depth == 1 (no hidden layers) would need a separate tiny path.
    assert depth >= 2, "Pallas path requires at least one hidden layer."

    pm = [float(m) for m in param_multipliers]
    assert len(pm) == depth + 1
    # All hidden layers share one multiplier by construction of DeepNN.__init__.
    assert all(abs(m - pm[1]) < 1e-12 for m in pm[1:depth])

    # bf16 operands for the MXU (f32 accumulation); halves weight HBM traffic.
    w0_bf = w0_t.astype(jnp.bfloat16)
    wh_bf = wh_t.astype(jnp.bfloat16)
    wf_f32 = wf.astype(jnp.float32)

    # Batch tiling: multiple of 8 (f32 sublane); pad B up to a tile multiple.
    tile_b = int(min(_round_up(int(tile_b), 8), _round_up(B, 8)))
    B_pad = _round_up(B, tile_b)
    if B_pad != B:
        x = jnp.pad(x, ((0, B_pad - B), (0, 0)))
    nb = B_pad // tile_b
    n_hidden = depth - 1

    kernel = _make_mlp_kernel(pm[0], pm[1], pm[depth], 1.0 / float(gamma))

    # Explicit VMEM budget: double-buffered blocks + activation scratch + slack.
    # (Keeps the kernel inside v7x's 64 MiB/TC while using v5e/v6e headroom.)
    est = 2 * (tile_b * d * 4 + d * H * 2 + H * H * 2 + H * 4 + tile_b * 4)
    est += tile_b * H * 4
    vmem_limit = int(min(max(2 * est, 8 << 20), 48 << 20))

    out = pl.pallas_call(
        kernel,
        out_shape=jax.ShapeDtypeStruct((B_pad, 1), jnp.float32),
        grid_spec=pltpu.PrefetchScalarGridSpec(
            num_scalar_prefetch=0,
            grid=(nb, n_hidden),
            in_specs=[
                pl.BlockSpec((tile_b, d), lambda b, k: (b, 0)),    # x: per batch tile
                pl.BlockSpec((d, H), lambda b, k: (0, 0)),         # w0: resident
                pl.BlockSpec((1, H, H), lambda b, k: (k, 0, 0)),   # wh: streamed per layer
                pl.BlockSpec((1, H), lambda b, k: (0, 0)),         # wf: resident
            ],
            out_specs=pl.BlockSpec((tile_b, 1), lambda b, k: (b, 0)),
            scratch_shapes=[pltpu.VMEM((tile_b, H), jnp.float32)],  # activation carry
        ),
        compiler_params=pltpu.CompilerParams(
            dimension_semantics=("parallel", "arbitrary"),
            vmem_limit_bytes=vmem_limit,
        ),
    )(x, w0_bf, wh_bf, wf_f32)

    return out[:B, 0]  # matches torch .squeeze() / gamma (gamma folded in-kernel)


def init_deepnn_params(key, d, hidden_size, depth, mode="mup"):
    """Deterministic synthetic init mirroring DeepNN.__init__ shapes/std/multipliers."""
    keys = jax.random.split(key, depth + 1)
    weights = []          # PyTorch-layout weights: [out, in]
    param_multipliers = []
    prev_dim = d
    for layer_idx in range(depth):
        is_embedding = layer_idx == 0
        if mode.startswith("standard"):
            init_std = 1.0 if is_embedding else 1.0 / np.sqrt(hidden_size)
            mult = 1.0
        elif mode.startswith("ntk"):
            init_std = 1.0
            mult = 1.0 if is_embedding else 1.0 / np.sqrt(hidden_size)
        elif mode.startswith("mup"):
            init_std = 1.0 / np.sqrt(hidden_size)
            mult = np.sqrt(hidden_size) if is_embedding else 1.0
        else:
            raise ValueError(mode)
        w = jax.random.normal(keys[layer_idx], (hidden_size, prev_dim), jnp.float32) * init_std
        weights.append(w)
        param_multipliers.append(float(mult))
        prev_dim = hidden_size

    if mode.startswith("standard"):
        init_std, mult = 1.0 / np.sqrt(hidden_size), 1.0
    elif mode.startswith("ntk"):
        init_std, mult = 1.0, 1.0 / np.sqrt(hidden_size)
    else:  # mup
        init_std, mult = 1.0 / np.sqrt(hidden_size), 1.0 / np.sqrt(hidden_size)
    wf = jax.random.normal(keys[depth], (1, hidden_size), jnp.float32) * init_std
    weights.append(wf)
    param_multipliers.append(float(mult))
    return weights, param_multipliers


def reference_forward(x, weights, param_multipliers, gamma):
    """Pure-JAX f32 replica of DeepNN.forward (torch F.linear => x @ W.T)."""
    h = x
    depth = len(weights) - 1
    for i in range(depth):
        h = (h @ weights[i].T) * param_multipliers[i]
        h = jnp.maximum(h, 0.0)
    out = (h @ weights[depth].T) * param_multipliers[depth]
    return jnp.squeeze(out) / gamma


if __name__ == "__main__":
    # Small shapes consistent with the module's forward: x is [batch, d].
    # H=128 fills the 128-lane vreg / MXU columns; tile_b=32 exercises batch tiling.
    B, d, hidden_size, depth = 64, 16, 128, 4
    gamma = 2.0
    mode = "mup"  # non-trivial param_multipliers

    key = jax.random.PRNGKey(0)
    k_x, k_w = jax.random.split(key)
    x = jax.random.normal(k_x, (B, d), jnp.float32)

    weights, param_multipliers = init_deepnn_params(k_w, d, hidden_size, depth, mode)

    # Pre-transpose matmul weights for the kernel (x @ W.T == x @ W_t).
    w0_t = weights[0].T                                   # [d, H]
    wh_t = jnp.stack([w.T for w in weights[1:depth]], 0)  # [depth-1, H, H]
    wf = weights[depth]                                   # [1, H] (torch layout)

    out = deepnn_forward(x, w0_t, wh_t, wf, param_multipliers, gamma, tile_b=32)
    out = jax.block_until_ready(out)

    ref = reference_forward(x, weights, param_multipliers, gamma)
    # bf16 MXU operands (f32 accumulation) vs f32 reference -> loosened tolerance.
    np.testing.assert_allclose(np.asarray(out), np.asarray(ref), rtol=5e-2, atol=5e-2)

    print("KERNEL_OK")
</pallas_src>

<mosaic_0001>
module attributes {stable_mosaic.version = 11 : i64} {
  func.func @kernel(%arg0: i32, %arg1: i32, %arg2: memref<32x16xf32, #tpu.memory_space<vmem>>, %arg3: memref<16x128xbf16, #tpu.memory_space<vmem>>, %arg4: memref<1x128x128xbf16, #tpu.memory_space<vmem>>, %arg5: memref<1x128xf32, #tpu.memory_space<vmem>>, %arg6: memref<32x1xf32, #tpu.memory_space<vmem>>, %arg7: memref<32x128xf32, #tpu.memory_space<vmem>>) attributes {dimension_semantics = [#tpu.dimension_semantics<parallel>, #tpu.dimension_semantics<arbitrary>], iteration_bounds = array<i64: 2, 3>, scalar_prefetch = 0 : i64, scratch_operands = 1 : i64, tpu.core_type = #tpu.core_type<tc>, window_params = [{transform_indices = @transform_0, window_bounds = array<i64: 32, 16>}, {pipeline_mode = #tpu.pipeline_mode<synchronous>, transform_indices = @transform_1, window_bounds = array<i64: 16, 128>}, {transform_indices = @transform_2, window_bounds = array<i64: 1, 128, 128>}, {pipeline_mode = #tpu.pipeline_mode<synchronous>, transform_indices = @transform_3, window_bounds = array<i64: 1, 128>}, {transform_indices = @transform_4, window_bounds = array<i64: 32, 1>}]} {
    %c0_i32 = arith.constant 0 : i32
    %0 = arith.cmpi eq, %arg1, %c0_i32 : i32
    %1 = arith.extui %0 : i1 to i32
    %c0_i32_0 = arith.constant 0 : i32
    %2 = arith.cmpi ne, %1, %c0_i32_0 : i32
    scf.if %2 {
      %c0_10 = arith.constant 0 : index
      %c0_11 = arith.constant 0 : index
      %16 = vector.load %arg2[%c0_10, %c0_11] : memref<32x16xf32, #tpu.memory_space<vmem>>, vector<32x16xf32>
      %17 = arith.truncf %16 : vector<32x16xf32> to vector<32x16xbf16>
      %c0_12 = arith.constant 0 : index
      %c0_13 = arith.constant 0 : index
      %18 = vector.load %arg3[%c0_12, %c0_13] : memref<16x128xbf16, #tpu.memory_space<vmem>>, vector<16x128xbf16>
      %cst_14 = arith.constant dense<0.000000e+00> : vector<32x128xf32>
      %19 = tpu.matmul %17, %18, %cst_14 {dimension_numbers = #tpu.dot_dimension_numbers<[1], [0], [0], [1], [0, 0, 1, 1], [], []>} : vector<32x16xbf16>, vector<16x128xbf16>, vector<32x128xf32> -> vector<32x128xf32>
      %cst_15 = arith.constant 11.3137083 : f32
      %20 = vector.broadcast %cst_15 : f32 to vector<32x128xf32>
      %21 = arith.mulf %19, %20 : vector<32x128xf32>
      %cst_16 = arith.constant 0.000000e+00 : f32
      %22 = vector.broadcast %cst_16 : f32 to vector<32x128xf32>
      %23 = arith.maximumf %21, %22 : vector<32x128xf32>
      %c0_17 = arith.constant 0 : index
      %c0_18 = arith.constant 0 : index
      %24 = vector.load %arg7[%c0_17, %c0_18] : memref<32x128xf32, #tpu.memory_space<vmem>>, vector<32x128xf32>
      tpu.vector_store %arg7[%c0_17, %c0_18], %23 {strides = array<i32>} : memref<32x128xf32, #tpu.memory_space<vmem>>, vector<32x128xf32>,
    } else {
    }
    %c0 = arith.constant 0 : index
    %c0_1 = arith.constant 0 : index
    %3 = vector.load %arg7[%c0, %c0_1] : memref<32x128xf32, #tpu.memory_space<vmem>>, vector<32x128xf32>
    %4 = arith.truncf %3 : vector<32x128xf32> to vector<32x128xbf16>
    %c0_2 = arith.constant 0 : index
    %c0_3 = arith.constant 0 : index
    %c0_4 = arith.constant 0 : index
    %5 = vector.load %arg4[%c0_2, %c0_3, %c0_4] : memref<1x128x128xbf16, #tpu.memory_space<vmem>>, vector<1x128x128xbf16>
    %6 = vector.shape_cast %5 : vector<1x128x128xbf16> to vector<128x128xbf16>
    %cst = arith.constant dense<0.000000e+00> : vector<32x128xf32>
    %7 = tpu.matmul %4, %6, %cst {dimension_numbers = #tpu.dot_dimension_numbers<[1], [0], [0], [1], [0, 0, 1, 1], [], []>} : vector<32x128xbf16>, vector<128x128xbf16>, vector<32x128xf32> -> vector<32x128xf32>
    %cst_5 = arith.constant 1.000000e+00 : f32
    %8 = vector.broadcast %cst_5 : f32 to vector<32x128xf32>
    %9 = arith.mulf %7, %8 : vector<32x128xf32>
    %cst_6 = arith.constant 0.000000e+00 : f32
    %10 = vector.broadcast %cst_6 : f32 to vector<32x128xf32>
    %11 = arith.maximumf %9, %10 : vector<32x128xf32>
    %c0_7 = arith.constant 0 : index
    %c0_8 = arith.constant 0 : index
    %12 = vector.load %arg7[%c0_7, %c0_8] : memref<32x128xf32, #tpu.memory_space<vmem>>, vector<32x128xf32>
    tpu.vector_store %arg7[%c0_7, %c0_8], %11 {strides = array<i32>} : memref<32x128xf32, #tpu.memory_space<vmem>>, vector<32x128xf32>,
    %c2_i32 = arith.constant 2 : i32
    %13 = arith.cmpi eq, %arg1, %c2_i32 : i32
    %14 = arith.extui %13 : i1 to i32
    %c0_i32_9 = arith.constant 0 : i32
    %15 = arith.cmpi ne, %14, %c0_i32_9 : i32
    scf.if %15 {
      %c0_10 = arith.constant 0 : index
      %c0_11 = arith.constant 0 : index
      %16 = vector.load %arg7[%c0_10, %c0_11] : memref<32x128xf32, #tpu.memory_space<vmem>>, vector<32x128xf32>
      %c0_12 = arith.constant 0 : index
      %c0_13 = arith.constant 0 : index
      %17 = vector.load %arg5[%c0_12, %c0_13] : memref<1x128xf32, #tpu.memory_space<vmem>>, vector<1x128xf32>
      %18 = vector.broadcast %17 : vector<1x128xf32> to vector<32x128xf32>
      %19 = arith.mulf %16, %18 : vector<32x128xf32>
      %cst_14 = arith.constant dense<0.000000e+00> : vector<32xf32>
      %20 = vector.multi_reduction <add>, %19, %cst_14 [1] : vector<32x128xf32> to vector<32xf32>
      %21 = vector.shape_cast %20 : vector<32xf32> to vector<32x1xf32>
      %cst_15 = arith.constant 0.0441941731 : f32
      %22 = vector.broadcast %cst_15 : f32 to vector<32x1xf32>
      %23 = arith.mulf %21, %22 : vector<32x1xf32>
      %c0_16 = arith.constant 0 : index
      %c0_17 = arith.constant 0 : index
      %24 = vector.load %arg6[%c0_16, %c0_17] : memref<32x1xf32, #tpu.memory_space<vmem>>, vector<32x1xf32>
      tpu.vector_store %arg6[%c0_16, %c0_17], %23 {strides = array<i32>} : memref<32x1xf32, #tpu.memory_space<vmem>>, vector<32x1xf32>,
    } else {
    }
    return
  }
  func.func @transform_0(%arg0: i32, %arg1: i32) -> (i32, i32) {
    %c0_i32 = arith.constant 0 : i32
    %c0_i32_0 = arith.constant 0 : i32
    return %arg0, %c0_i32 : i32, i32
  }
  func.func @transform_1(%arg0: i32, %arg1: i32) -> (i32, i32) {
    %c0_i32 = arith.constant 0 : i32
    %c0_i32_0 = arith.constant 0 : i32
    %c0_i32_1 = arith.constant 0 : i32
    return %c0_i32, %c0_i32_0 : i32, i32
  }
  func.func @transform_2(%arg0: i32, %arg1: i32) -> (i32, i32, i32) {
    %c0_i32 = arith.constant 0 : i32
    %c0_i32_0 = arith.constant 0 : i32
    %c0_i32_1 = arith.constant 0 : i32
    return %arg1, %c0_i32, %c0_i32_0 : i32, i32, i32
  }
  func.func @transform_3(%arg0: i32, %arg1: i32) -> (i32, i32) {
    %c0_i32 = arith.constant 0 : i32
    %c0_i32_0 = arith.constant 0 : i32
    %c0_i32_1 = arith.constant 0 : i32
    return %c0_i32, %c0_i32_0 : i32, i32
  }
  func.func @transform_4(%arg0: i32, %arg1: i32) -> (i32, i32) {
    %c0_i32 = arith.constant 0 : i32
    %c0_i32_0 = arith.constant 0 : i32
    return %arg0, %c0_i32 : i32, i32
  }
}

</mosaic_0001>

<llo_original>
// kernel: tpu_custom_call.1
$region0: #{tpu_custom_call.1}
  #allocation0 [shape = 'u32[]', space=smem, size = 0x4, offset = 0x4, fixed_abs, tag = 'smem constant byte address 0x4 - core index']
  #allocation1 [shape = 'u32[144,128]{1,0:T(1,128)}', space=vmem, size = 0x12000, scoped, tag = 'internal scratch']
  #allocation2 [shape = 'f32[32,128]{1,0:T(8,128)}', space=vmem, size = 0x4000, scoped, tag = 'scratch operand']
  %s0 = inlined_call_operand.vmem [shape: f32[64,16], index: 0, kind: input, shape index: {}]
  %s1 = inlined_call_operand.vmem [shape: bf16[16,128], index: 1, kind: input, shape index: {}]
  %s2 = inlined_call_operand.hbm [shape: bf16[3,128,128], index: 2, kind: input, shape index: {}]
  %s3 = inlined_call_operand.vmem [shape: f32[1,128], index: 3, kind: input, shape index: {}]
  %s4 = inlined_call_operand.vmem [shape: f32[64,1], index: 4, kind: output, shape index: {}]
  %s5 = sld [smem:[#allocation0]]
  $region61: #{tpu_custom_call.1} parent=0
    _
  %s7 = ssub.s32 1, %s5
  %s8 = scalar_select 0, %s7, %s5
  $region1: #{tpu_custom_call.1} parent=0
    #allocation3 [shape = 'u8[65536]{0}', space=vmem, size = 0x10000, scoped, tag = 'input window, operand 2']
    #allocation4 [shape = 's32[2]{0}', space=sflag, size = 0x8, scoped, tag = 'scoped memory for tpu_custom_call.1']
    %9 = vsyncpa [#allocation4], 0
    %s10 = scalar_lea.sflag [#allocation4], 1
    %11 = vsyncpa %s10, 0
    loop: start=0, step=1, limit=8
    $region2: #{tpu_custom_call.1} parent=1 // loop_pre_header
      _
    $region3: #{tpu_custom_call.1} parent=1 // loop_header
      %s13 = sphi 0, %s17
      %p14 = scmp.ge.s32.totalorder %s13, 8
      %s20 = sphi 0, %s32
      %s21 = sphi 0, %s28
      %s22 = sphi 0, %s20
      %s23 = sphi 0, %s21
      %s24 = sphi 0, %s22
      %s25 = sphi 0, %s23
      %s35 = sphi 0, %s37
      %s38 = sphi 0, %s35
      %s39 = sphi 0, %s38
      %s55 = sphi 0, %s39
      %s59 = sphi 0, %s59
      %s61 = sphi 0, %s59
      %s62 = sphi 0, %s61
      %s76 = sphi 0, %s62
      %s82 = sphi 0, %s84
      %s85 = sphi 0, %s82
      %s86 = sphi 0, %s85
      %s102 = sphi 0, %s86
      %s106 = sphi 0, %s106
      %s108 = sphi 0, %s106
      %s109 = sphi 0, %s108
      %s123 = sphi 0, %s109
      %s129 = sphi 0, %s131
      %s132 = sphi 0, %s129
      %s133 = sphi 0, %s132
      %s149 = sphi 0, %s133
    $region4: #{tpu_custom_call.1} parent=1 // loop_header_branch
      %16 = sbr.rel (%p14) target = $region8
    $region5: #{tpu_custom_call.1} parent=1 // loop_body
      %s18 = ssub.s32 %s13, 1
      %s19 = ssub.s32 %s13, 2
      %s26 = sadd.s32 1, %s21
      %p27 = scmp.ge.s32.totalorder %s26, 3
      %s28 = scalar_select %p27, 0, %s26
      %s29 = sadd.s32 1, %s20
      %s30 = scalar_select %p27, %s29, %s20
      %p31 = scmp.ge.s32.totalorder %s30, 2
      %s32 = scalar_select %p31, 0, %s30
      %s33 = ssub.s32 %s20, %s32
      %p34 = scmp.eq.s32.totalorder %s33, 0
      %s36 = sadd.s32 %s35, 1
      %s37 = scalar_select %p34, %s35, %s36
      %p40 = pneg %p34
      %p41 = scmp.eq.s32.totalorder %s13, 5
      %p42 = por %p40, %p41
      %p43 = scmp.ne.s32.totalorder %s35, %s38
      %p44 = scmp.eq.s32.totalorder %s13, 0
      %p45 = por %p43, %p44
      %p46 = scmp.ne.s32.totalorder %s35, %s38
      %p47 = scmp.eq.s32.totalorder %s18, 5
      %p48 = por %p46, %p47
      %p49 = scmp.ne.s32.totalorder %s38, %s39
      %p50 = scmp.eq.s32.totalorder %s18, 0
      %p51 = por %p49, %p50
      %p52 = scmp.ne.s32.totalorder %s38, %s39
      %p53 = scmp.eq.s32.totalorder %s19, 5
      %p54 = por %p52, %p53
      %p56 = scmp.ne.s32.totalorder %s39, %s55
      %p57 = scmp.eq.s32.totalorder %s19, 0
      %p58 = por %p56, %p57
      %s60 = sadd.s32 %s59, 1
      %p63 = scmp.eq.s32.totalorder %s13, 5
      %p64 = scmp.ne.s32.totalorder %s59, %s61
      %p65 = scmp.eq.s32.totalorder %s13, 0
      %p66 = por %p64, %p65
      %p67 = scmp.ne.s32.totalorder %s59, %s61
      %p68 = scmp.eq.s32.totalorder %s18, 5
      %p69 = por %p67, %p68
      %p70 = scmp.ne.s32.totalorder %s61, %s62
      %p71 = scmp.eq.s32.totalorder %s18, 0
      %p72 = por %p70, %p71
      %p73 = scmp.ne.s32.totalorder %s61, %s62
      %p74 = scmp.eq.s32.totalorder %s19, 5
      %p75 = por %p73, %p74
      %p77 = scmp.ne.s32.totalorder %s62, %s76
      %p78 = scmp.eq.s32.totalorder %s19, 0
      %p79 = por %p77, %p78
      %s80 = ssub.s32 %s21, %s28
      %p81 = scmp.eq.s32.totalorder %s80, 0
      %s83 = sadd.s32 %s82, 1
      %s84 = scalar_select %p81, %s82, %s83
      %p87 = pneg %p81
      %p88 = scmp.eq.s32.totalorder %s13, 5
      %p89 = por %p87, %p88
      %p90 = scmp.ne.s32.totalorder %s82, %s85
      %p91 = scmp.eq.s32.totalorder %s13, 0
      %p92 = por %p90, %p91
      %p93 = scmp.ne.s32.totalorder %s82, %s85
      %p94 = scmp.eq.s32.totalorder %s18, 5
      %p95 = por %p93, %p94
      %p96 = scmp.ne.s32.totalorder %s85, %s86
      %p97 = scmp.eq.s32.totalorder %s18, 0
      %p98 = por %p96, %p97
      %p99 = scmp.ne.s32.totalorder %s85, %s86
      %p100 = scmp.eq.s32.totalorder %s19, 5
      %p101 = por %p99, %p100
      %p103 = scmp.ne.s32.totalorder %s86, %s102
      %p104 = scmp.eq.s32.totalorder %s19, 0
      %p105 = por %p103, %p104
      %s107 = sadd.s32 %s106, 1
      %p110 = scmp.eq.s32.totalorder %s13, 5
      %p111 = scmp.ne.s32.totalorder %s106, %s108
      %p112 = scmp.eq.s32.totalorder %s13, 0
      %p113 = por %p111, %p112
      %p114 = scmp.ne.s32.totalorder %s106, %s108
      %p115 = scmp.eq.s32.totalorder %s18, 5
      %p116 = por %p114, %p115
      %p117 = scmp.ne.s32.totalorder %s108, %s109
      %p118 = scmp.eq.s32.totalorder %s18, 0
      %p119 = por %p117, %p118
      %p120 = scmp.ne.s32.totalorder %s108, %s109
      %p121 = scmp.eq.s32.totalorder %s19, 5
      %p122 = por %p120, %p121
      %p124 = scmp.ne.s32.totalorder %s109, %s123
      %p125 = scmp.eq.s32.totalorder %s19, 0
      %p126 = por %p124, %p125
      %s127 = ssub.s32 %s20, %s32
      %p128 = scmp.eq.s32.totalorder %s127, 0
      %s130 = sadd.s32 %s129, 1
      %s131 = scalar_select %p128, %s129, %s130
      %p134 = pneg %p128
      %p135 = scmp.eq.s32.totalorder %s13, 5
      %p136 = por %p134, %p135
      %p137 = scmp.ne.s32.totalorder %s129, %s132
      %p138 = scmp.eq.s32.totalorder %s13, 0
      %p139 = por %p137, %p138
      %p140 = scmp.ne.s32.totalorder %s129, %s132
      %p141 = scmp.eq.s32.totalorder %s18, 5
      %p142 = por %p140, %p141
      %p143 = scmp.ne.s32.totalorder %s132, %s133
      %p144 = scmp.eq.s32.totalorder %s18, 0
      %p145 = por %p143, %p144
      %p146 = scmp.ne.s32.totalorder %s132, %s133
      %p147 = scmp.eq.s32.totalorder %s19, 5
      %p148 = por %p146, %p147
      %p150 = scmp.ne.s32.totalorder %s133, %s149
      %p151 = scmp.eq.s32.totalorder %s19, 0
      %p152 = por %p150, %p151
      %p153 = scmp.le.s32.totalorder 1, %s13
      %p154 = scmp.lt.s32.totalorder %s13, 7
      %p155 = pnand %p153, %p154
      %p156 = pneg %p155
      // Predicated region
      $region9: #{tpu_custom_call.1} parent=5 // pred_check
        _
      $region10: #{tpu_custom_call.1} parent=5 // pred_check_branch
        %158 = sbr.rel (%p155) target = $region12
      $region11: #{tpu_custom_call.1} parent=5 // pred_region
        %s159 = ssub.s32 %s13, 1
        // Predicated region
        $region13: #{tpu_custom_call.1} parent=11 // pred_check
          %p160 = pneg %p72
        $region14: #{tpu_custom_call.1} parent=11 // pred_check_branch
          %162 = sbr.rel (%p160) target = $region16
        $region15: #{tpu_custom_call.1} parent=11 // pred_region
          _
        $region16: #{tpu_custom_call.1} parent=11 // pred_fallthru
          _
        // Predicated region
        $region17: #{tpu_custom_call.1} parent=11 // pred_check
          %p163 = pneg %p119
        $region18: #{tpu_custom_call.1} parent=11 // pred_check_branch
          %165 = sbr.rel (%p163) target = $region20
        $region19: #{tpu_custom_call.1} parent=11 // pred_region
          _
        $region20: #{tpu_custom_call.1} parent=11 // pred_fallthru
          _
      $region12: #{tpu_custom_call.1} parent=5 // pred_fallthru
        _
      %p166 = scmp.lt.s32.totalorder %s13, 6
      // Predicated region
      $region21: #{tpu_custom_call.1} parent=5 // pred_check
        %p167 = pneg %p166
      $region22: #{tpu_custom_call.1} parent=5 // pred_check_branch
        %169 = sbr.rel (%p167) target = $region24
      $region23: #{tpu_custom_call.1} parent=5 // pred_region
        // Predicated region
        $region25: #{tpu_custom_call.1} parent=23 // pred_check
          %p170 = pneg %p45
        $region26: #{tpu_custom_call.1} parent=23 // pred_check_branch
          %172 = sbr.rel (%p170) target = $region28
        $region27: #{tpu_custom_call.1} parent=23 // pred_region
          %s173 = smul.u32 4, %s20
          %p174 = scmp.lt.s32.totalorder %s173, 7
          %s175 = scalar_select %p174, %s173, 7
          %s176 = smul.addr %s175, 8
          %s177 = scalar_lea.vmem %s0, %s176
          %s178 = smul.u32 4, %s20
        $region28: #{tpu_custom_call.1} parent=23 // pred_fallthru
          _
        // Predicated region
        $region29: #{tpu_custom_call.1} parent=23 // pred_check
          %p179 = pneg %p92
        $region30: #{tpu_custom_call.1} parent=23 // pred_check_branch
          %181 = sbr.rel (%p179) target = $region32
        $region31: #{tpu_custom_call.1} parent=23 // pred_region
          %s182 = sand.u32 %s82, 1
          %s183 = scalar_lea.sflag [#allocation4], %s182
          %s184 = sand.u32 %s82, 1
          %s185 = smul.addr %s184, 64
          %s186 = scalar_lea.vmem [#allocation3], %s185
          %s188 = ssub.s32 1024, 1024
          %189 = vsyncadd %s183, %s188
          %s190 = smul.addr %s21, 16
          %s191 = smul.addr %s190, 64
          %s192 = scalar_lea.hbm %s2, %s191
          %s193 = sshll.u32 %s186, 4
          %s194 = int_to_ptr.vmem [resolvable:$true] %s193
          %199 = dma.hbm_to_vmem [thread:$0]  %s192, 1024, %s194, %s183, 64, 64, 4
        $region32: #{tpu_custom_call.1} parent=23 // pred_fallthru
          _
      $region24: #{tpu_custom_call.1} parent=5 // pred_fallthru
        _
      %p200 = scmp.le.s32.totalorder 1, %s13
      %p201 = scmp.lt.s32.totalorder %s13, 7
      %p202 = pnand %p200, %p201
      %p203 = pneg %p202
      // Predicated region
      $region33: #{tpu_custom_call.1} parent=5 // pred_check
        _
      $region34: #{tpu_custom_call.1} parent=5 // pred_check_branch
        %205 = sbr.rel (%p202) target = $region36
      $region35: #{tpu_custom_call.1} parent=5 // pred_region
        %s206 = ssub.s32 %s13, 1
        %s207 = sand.u32 %s85, 1
        %s208 = scalar_lea.sflag [#allocation4], %s207
        %s209 = sand.u32 %s85, 1
        %s210 = smul.addr %s209, 64
        %s211 = scalar_lea.vmem [#allocation3], %s210
        // Predicated region
        $region37: #{tpu_custom_call.1} parent=35 // pred_check
          %p212 = pneg %p98
        $region38: #{tpu_custom_call.1} parent=35 // pred_check_branch
          %214 = sbr.rel (%p212) target = $region40
        $region39: #{tpu_custom_call.1} parent=35 // pred_region
          %215 = dma.done %s208, 1024
        $region40: #{tpu_custom_call.1} parent=35 // pred_fallthru
          _
        %s216 = smul.u32 4, %s22
        %p217 = scmp.lt.s32.totalorder %s216, 7
        %s218 = scalar_select %p217, %s216, 7
        %s219 = smul.addr %s218, 8
        %s220 = scalar_lea.vmem %s0, %s219
        %p221 = pneg %p51
        %p222 = pneg %p48
        %p223 = pneg %p72
        %p224 = pneg %p69
        %s225 = sand.u32 %s85, 1
        %s226 = scalar_lea.sflag [#allocation4], %s225
        %s227 = sand.u32 %s85, 1
        %s228 = smul.addr %s227, 64
        %s229 = scalar_lea.vmem [#allocation3], %s228
        %p230 = pneg %p98
        %p231 = pneg %p95
        %p232 = pneg %p119
        %p233 = pneg %p116
        %p234 = pneg %p145
        %p235 = pneg %p142
        %s236 = smul.u32 4, %s22
        %p237 = scmp.lt.s32.totalorder %s236, 7
        %s238 = scalar_select %p237, %s236, 7
        %s239 = smul.addr %s238, 8
        %s240 = scalar_lea.vmem %s4, %s239
        %s241 = smul.u32 4, %s22
        %p242 = scmp.lt.s32.totalorder %s241, 7
        %s243 = scalar_select %p242, %s241, 7
        %s244 = smul.addr %s243, 8
        %s245 = scalar_lea.vmem %s0, %s244
        %s246 = smul.u32 4, %s22
        %s247 = smul.u32 4, %s22
        %p248 = scmp.lt.s32.totalorder %s247, 7
        %s249 = scalar_select %p248, %s247, 7
        %s250 = smul.addr %s249, 8
        %s251 = scalar_lea.vmem %s4, %s250
        %s252 = smul.u32 4, %s22
        %p254 = scmp.eq.s32.totalorder %s23, 0
        // Predicated region
        $region41: #{tpu_custom_call.1} parent=35 // pred_check
          %p255 = pneg %p254
        $region42: #{tpu_custom_call.1} parent=35 // pred_check_branch
          %257 = sbr.rel (%p255) target = $region44
        $region43: #{tpu_custom_call.1} parent=35 // pred_region
          %v258 = vld [vmem:[%s245] sm:$0xff]
          %v259 = vld [vmem:[%s245 + $0x8] sm:$0xff]
          %v260 = vld [vmem:[%s245 + $0x10] sm:$0xff]
          %v261 = vld [vmem:[%s245 + $0x18] sm:$0xff]
          %v262 = vpack.c.bf16 %v259, %v258
          %v263 = vpack.c.bf16 %v261, %v260
          %v264 = vld [vmem:[%s1] sm:$0xf]
          %v265 = vld [vmem:[%s1 + $0x4] sm:$0xf]
          %v268 = vunpack.c.l.b16 %v264
          %v269 = vunpack.c.l.b16 %v265
          %v270 = vpack.c.b16 %v269, %v268
          %vm272 = vcmask 130048
          %v274 = vsel %vm272, %v262, 0
          %v277 = vsel %vm272, %v263, 0
          %279 = vmatprep.subr.bf16.mxu0 0
          %280 = vmatpush1.bf16.msra.mxu0 0
          %281 = vmatprep.subr.bf16.mxu0 0
          %282 = vmatpush1.bf16.msra.mxu0 0
          %283 = vmatprep.subr.bf16.mxu0 0
          %284 = vmatpush1.bf16.msra.mxu0 0
          %285 = vmatprep.subr.bf16.mxu0 0
          %286 = vmatpush1.bf16.msra.mxu0 0
          %287 = vmatprep.subr.bf16.mxu0 0
          %288 = vmatpush1.bf16.msra.mxu0 0
          %289 = vmatprep.subr.bf16.mxu0 0
          %290 = vmatpush1.bf16.msra.mxu0 0
          %291 = vmatprep.subr.bf16.mxu0 0
          %292 = vmatpush1.bf16.msra.mxu0 0
          %293 = vmatprep.subr.bf16.mxu0 0
          %294 = vmatpush1.bf16.msra.mxu0 %v270
          %295 = vmatprep.subr.bf16.mxu0 0
          %296 = vmatpush2.bf16.msra.mxu0 0
          %297 = vmatprep.subr.bf16.mxu0 0
          %298 = vmatpush2.bf16.msra.mxu0 0
          %299 = vmatprep.subr.bf16.mxu0 0
          %300 = vmatpush2.bf16.msra.mxu0 0
          %301 = vmatprep.subr.bf16.mxu0 0
          %302 = vmatpush2.bf16.msra.mxu0 0
          %303 = vmatprep.subr.bf16.mxu0 0
          %304 = vmatpush2.bf16.msra.mxu0 0
          %305 = vmatprep.subr.bf16.mxu0 0
          %306 = vmatpush2.bf16.msra.mxu0 0
          %307 = vmatprep.subr.bf16.mxu0 0
          %308 = vmatpush2.bf16.msra.mxu0 0
          %309 = vmatprep.subr.bf16.mxu0 0
          %310 = vmatpush2.bf16.msra.mxu0 0
          %311 = vmatprep.mubr.bf16.mxu0 0
          %312 = vmatmul.mubr.bf16.gmra.mxu0 %v274
          %v313 = vpop.f32.mrf.mxu0
          %v314 = vadd.f32 0.0, %v313
          %v315 = vpop.f32.mrf.mxu0
          %v316 = vpop.f32.mrf.mxu0
          %v317 = vadd.f32 0.0, %v316
          %v318 = vpop.f32.mrf.mxu0
          %319 = vmatprep.mubr.bf16.mxu0 0
          %320 = vmatmul.mubr.bf16.gmra.mxu0 %v277
          %v321 = vpop.f32.mrf.mxu0
          %v322 = vadd.f32 0.0, %v321
          %v323 = vpop.f32.mrf.mxu0
          %v324 = vpop.f32.mrf.mxu0
          %v325 = vadd.f32 0.0, %v324
          %v326 = vpop.f32.mrf.mxu0
          %327 = vdwg.mxu0
          %v328 = vmul.f32 %v314, 11.313708
          %v329 = vmul.f32 %v317, 11.313708
          %v330 = vmul.f32 %v322, 11.313708
          %v331 = vmul.f32 %v325, 11.313708
          %v332 = vmax.f32 %v328, 0.0
          %v333 = vmax.f32 %v329, 0.0
          %v334 = vmax.f32 %v330, 0.0
          %v335 = vmax.f32 %v331, 0.0
          %336 = vst [vmem:[#allocation2] sm:$0xff] %v332
          %337 = vst [vmem:[#allocation2 + $0x8] sm:$0xff] %v333
          %338 = vst [vmem:[#allocation2 + $0x10] sm:$0xff] %v334
          %339 = vst [vmem:[#allocation2 + $0x18] sm:$0xff] %v335
        $region44: #{tpu_custom_call.1} parent=35 // pred_fallthru
          _
        %v340 = vld [vmem:[#allocation2] sm:$0xff]
        %v341 = vld [vmem:[#allocation2 + $0x8] sm:$0xff]
        %v342 = vld [vmem:[#allocation2 + $0x10] sm:$0xff]
        %v343 = vld [vmem:[#allocation2 + $0x18] sm:$0xff]
        %v344 = vpack.c.bf16 %v341, %v340
        %v345 = vpack.c.bf16 %v343, %v342
        %v346 = vld [vmem:[%s211] sm:$0xf]
        %v347 = vld [vmem:[%s211 + $0x4] sm:$0xf]
        %v348 = vld [vmem:[%s211 + $0x8] sm:$0xf]
        %v349 = vld [vmem:[%s211 + $0xc] sm:$0xf]
        %v350 = vld [vmem:[%s211 + $0x10] sm:$0xf]
        %v351 = vld [vmem:[%s211 + $0x14] sm:$0xf]
        %v352 = vld [vmem:[%s211 + $0x18] sm:$0xf]
        %v353 = vld [vmem:[%s211 + $0x1c] sm:$0xf]
        %v354 = vld [vmem:[%s211 + $0x20] sm:$0xf]
        %v355 = vld [vmem:[%s211 + $0x24] sm:$0xf]
        %v356 = vld [vmem:[%s211 + $0x28] sm:$0xf]
        %v357 = vld [vmem:[%s211 + $0x2c] sm:$0xf]
        %v358 = vld [vmem:[%s211 + $0x30] sm:$0xf]
        %v359 = vld [vmem:[%s211 + $0x34] sm:$0xf]
        %v360 = vld [vmem:[%s211 + $0x38] sm:$0xf]
        %v361 = vld [vmem:[%s211 + $0x3c] sm:$0xf]
        %v378 = vunpack.c.l.b16 %v346
        %v379 = vunpack.c.l.b16 %v347
        %v380 = vunpack.c.l.b16 %v348
        %v381 = vunpack.c.l.b16 %v349
        %v382 = vunpack.c.l.b16 %v350
        %v383 = vunpack.c.l.b16 %v351
        %v384 = vunpack.c.l.b16 %v352
        %v385 = vunpack.c.l.b16 %v353
        %v386 = vunpack.c.l.b16 %v354
        %v387 = vunpack.c.l.b16 %v355
        %v388 = vunpack.c.l.b16 %v356
        %v389 = vunpack.c.l.b16 %v357
        %v390 = vunpack.c.l.b16 %v358
        %v391 = vunpack.c.l.b16 %v359
        %v392 = vunpack.c.l.b16 %v360
        %v393 = vunpack.c.l.b16 %v361
        %v394 = vpack.c.b16 %v379, %v378
        %v395 = vpack.c.b16 %v381, %v380
        %v396 = vpack.c.b16 %v383, %v382
        %v397 = vpack.c.b16 %v385, %v384
        %v398 = vpack.c.b16 %v387, %v386
        %v399 = vpack.c.b16 %v389, %v388
        %v400 = vpack.c.b16 %v391, %v390
        %v401 = vpack.c.b16 %v393, %v392
        %410 = vmatprep.subr.bf16.mxu0 0
        %411 = vmatpush1.bf16.msra.mxu0 %v401
        %412 = vmatprep.subr.bf16.mxu0 0
        %413 = vmatpush1.bf16.msra.mxu0 %v400
        %414 = vmatprep.subr.bf16.mxu0 0
        %415 = vmatpush1.bf16.msra.mxu0 %v399
        %416 = vmatprep.subr.bf16.mxu0 0
        %417 = vmatpush1.bf16.msra.mxu0 %v398
        %418 = vmatprep.subr.bf16.mxu0 0
        %419 = vmatpush1.bf16.msra.mxu0 %v397
        %420 = vmatprep.subr.bf16.mxu0 0
        %421 = vmatpush1.bf16.msra.mxu0 %v396
        %422 = vmatprep.subr.bf16.mxu0 0
        %423 = vmatpush1.bf16.msra.mxu0 %v395
        %424 = vmatprep.subr.bf16.mxu0 0
        %425 = vmatpush1.bf16.msra.mxu0 %v394
        %426 = vmatprep.subr.bf16.mxu0 0
        %427 = vmatpush2.bf16.msra.mxu0 0
        %428 = vmatprep.subr.bf16.mxu0 0
        %429 = vmatpush2.bf16.msra.mxu0 0
        %430 = vmatprep.subr.bf16.mxu0 0
        %431 = vmatpush2.bf16.msra.mxu0 0
        %432 = vmatprep.subr.bf16.mxu0 0
        %433 = vmatpush2.bf16.msra.mxu0 0
        %434 = vmatprep.subr.bf16.mxu0 0
        %435 = vmatpush2.bf16.msra.mxu0 0
        %436 = vmatprep.subr.bf16.mxu0 0
        %437 = vmatpush2.bf16.msra.mxu0 0
        %438 = vmatprep.subr.bf16.mxu0 0
        %439 = vmatpush2.bf16.msra.mxu0 0
        %440 = vmatprep.subr.bf16.mxu0 0
        %441 = vmatpush2.bf16.msra.mxu0 0
        %442 = vmatprep.mubr.bf16.mxu0 0
        %443 = vmatmul.mubr.bf16.gmra.mxu0 %v344
        %v444 = vpop.f32.mrf.mxu0
        %v445 = vadd.f32 0.0, %v444
        %v446 = vpop.f32.mrf.mxu0
        %v447 = vpop.f32.mrf.mxu0
        %v448 = vadd.f32 0.0, %v447
        %v449 = vpop.f32.mrf.mxu0
        %450 = vmatprep.mubr.bf16.mxu0 0
        %451 = vmatmul.mubr.bf16.gmra.mxu0 %v345
        %v452 = vpop.f32.mrf.mxu0
        %v453 = vadd.f32 0.0, %v452
        %v454 = vpop.f32.mrf.mxu0
        %v455 = vpop.f32.mrf.mxu0
        %v456 = vadd.f32 0.0, %v455
        %v457 = vpop.f32.mrf.mxu0
        %458 = vdwg.mxu0
        %v459 = vmax.f32 %v445, 0.0
        %v460 = vmax.f32 %v448, 0.0
        %v461 = vmax.f32 %v453, 0.0
        %v462 = vmax.f32 %v456, 0.0
        %463 = vst [vmem:[#allocation2] sm:$0xff] %v459
        %464 = vst [vmem:[#allocation2 + $0x8] sm:$0xff] %v460
        %465 = vst [vmem:[#allocation2 + $0x10] sm:$0xff] %v461
        %466 = vst [vmem:[#allocation2 + $0x18] sm:$0xff] %v462
        %p467 = scmp.eq.s32.totalorder %s23, 2
        // Predicated region
        $region45: #{tpu_custom_call.1} parent=35 // pred_check
          %p468 = pneg %p467
        $region46: #{tpu_custom_call.1} parent=35 // pred_check_branch
          %470 = sbr.rel (%p468) target = $region48
        $region47: #{tpu_custom_call.1} parent=35 // pred_region
          %v471 = vld [vmem:[#allocation2] sm:$0xff]
          %v472 = vld [vmem:[#allocation2 + $0x8] sm:$0xff]
          %v473 = vld [vmem:[#allocation2 + $0x10] sm:$0xff]
          %v474 = vld [vmem:[#allocation2 + $0x18] sm:$0xff]
          %v475 = vld [vmem:[%s3] sm:$0x1]
          %v477 = vlaneseq
          %v478 = vshrl.u32 %v477, 7
          %v479 = vsub.s32 0, %v478
          %v480 = vrot.slane %v475, %v479
          %v482 = vmul.f32 %v471, %v480
          %v483 = vmul.f32 %v472, %v480
          %v484 = vmul.f32 %v473, %v480
          %v485 = vmul.f32 %v474, %v480
          %486 = vadd.xlane.f32.xlu0 %v482
          %v487 = vpop.xlane.xlu0 %486
          %488 = vadd.xlane.f32.xlu0 %v483
          %v489 = vpop.xlane.xlu0 %488
          %490 = vadd.xlane.f32.xlu0 %v484
          %v491 = vpop.xlane.xlu0 %490
          %492 = vadd.xlane.f32.xlu0 %v485
          %v493 = vpop.xlane.xlu0 %492
          %v494 = vmul.f32 %v487, 0.044194173
          %v495 = vmul.f32 %v489, 0.044194173
          %v496 = vmul.f32 %v491, 0.044194173
          %v497 = vmul.f32 %v493, 0.044194173
          %vm498 = vcmask 7168
          %499 = vst.msk [vmem:[%s251] sm:$0xff] %vm498, %v494
          %500 = vst.msk [vmem:[%s251 + $0x8] sm:$0xff] %vm498, %v495
          %501 = vst.msk [vmem:[%s251 + $0x10] sm:$0xff] %vm498, %v496
          %502 = vst.msk [vmem:[%s251 + $0x18] sm:$0xff] %vm498, %v497
        $region48: #{tpu_custom_call.1} parent=35 // pred_fallthru
          _
        %s503 = smul.u32 4, %s22
        %p504 = scmp.lt.s32.totalorder %s503, 7
        %s505 = scalar_select %p504, %s503, 7
        %s506 = smul.addr %s505, 8
        %s507 = scalar_lea.vmem %s4, %s506
        // Predicated region
        $region49: #{tpu_custom_call.1} parent=35 // pred_check
          %p508 = pneg %p142
        $region50: #{tpu_custom_call.1} parent=35 // pred_check_branch
          %510 = sbr.rel (%p508) target = $region52
        $region51: #{tpu_custom_call.1} parent=35 // pred_region
          %s511 = smul.u32 4, %s22
        $region52: #{tpu_custom_call.1} parent=35 // pred_fallthru
          _
      $region36: #{tpu_custom_call.1} parent=5 // pred_fallthru
        _
      %p512 = scmp.le.s32.totalorder 2, %s13
      // Predicated region
      $region53: #{tpu_custom_call.1} parent=5 // pred_check
        %p513 = pneg %p512
      $region54: #{tpu_custom_call.1} parent=5 // pred_check_branch
        %515 = sbr.rel (%p513) target = $region56
      $region55: #{tpu_custom_call.1} parent=5 // pred_region
        %s516 = ssub.s32 %s13, 2
        // Predicated region
        $region57: #{tpu_custom_call.1} parent=55 // pred_check
          %p517 = pneg %p148
        $region58: #{tpu_custom_call.1} parent=55 // pred_check_branch
          %519 = sbr.rel (%p517) target = $region60
        $region59: #{tpu_custom_call.1} parent=55 // pred_region
          %s520 = smul.u32 4, %s24
          %p521 = scmp.lt.s32.totalorder %s520, 7
          %s522 = scalar_select %p521, %s520, 7
          %s523 = smul.addr %s522, 8
          %s524 = scalar_lea.vmem %s4, %s523
        $region60: #{tpu_custom_call.1} parent=55 // pred_fallthru
          _
      $region56: #{tpu_custom_call.1} parent=5 // pred_fallthru
        _
    $region6: #{tpu_custom_call.1} parent=1 // loop_footer
      %s17 = sadd.s32 1, %s13
    $region7: #{tpu_custom_call.1} parent=1 // loop_footer_branch
      %12 = sbr.rel target = $region3
    $region8: #{tpu_custom_call.1} parent=1 // loop_exit
      _
    %525 = vsyncpa [#allocation4], 1
    %s526 = scalar_lea.sflag [#allocation4], 1
    %527 = vsyncpa %s526, 1

</llo_original>
